<compile_context>
chip_gen: v7x
topology: tpu7x:2x2x1
jax: 0.10.0
libtpu: 0.0.40
codegen_flags: <defaults>
</compile_context>

<pallas_src>
import functools

import jax
import jax.numpy as jnp
from jax.experimental import pallas as pl
from jax.experimental.pallas import tpu as pltpu


_MIB = 1024 * 1024


def _vmem_budgets():
    """Returns (vmem_limit_bytes, double-buffered x-block budget in bytes)."""
    cap = None
    try:
        cap = int(pltpu.get_tpu_info().vmem_capacity_bytes)
    except Exception:  # interpret mode / older runtime: assume v7x-sized VMEM
        cap = None
    if not cap or cap <= 0:
        cap = 64 * _MIB
    # Leave ~25% headroom for compiler scratch + the double-buffered weight,
    # and cap at 96 MiB (well under v5e/v6e's 128 MiB physical VMEM).
    limit = min((cap * 3) // 4, 96 * _MIB)
    return int(limit), int(limit // 2)


def _pick_hw_tile(hw, rows, itemsize, budget, max_lane=8192):
    """Lane (HW) tile: full extent if hw<=128, else a multiple of 128 chosen so
    two double-buffered [rows, hw_tile] blocks fit in `budget` bytes."""
    if hw <= 128:
        return hw
    max_tile = (budget // (2 * rows * itemsize)) // 128 * 128
    max_tile = max(128, min(max_tile, max_lane))
    best = 0
    t = 128
    while t <= min(hw, max_tile):
        if hw % t == 0:
            best = t  # exact divisor: no tail, no masking
        t += 128
    if best:
        return best
    # No multiple-of-128 divisor fits: dense tile, mask only the tail block.
    return min(max_tile, max(128, (hw // 128) * 128))


def _pick_cin_tile(cin, hw, itemsize, budget, target_lanes=512):
    """Sublane (Cin) tile: full Cin if it fits with >= target_lanes lanes,
    otherwise the largest multiple-of-8 divisor of Cin that does."""
    lanes = min(max(hw, 128), target_lanes)
    if cin <= 8 or 2 * cin * lanes * itemsize <= budget:
        return cin
    max_rows = budget // (2 * lanes * itemsize)
    best = None
    c = 8
    while c <= cin:
        if cin % c == 0 and c <= max_rows:
            best = c
        c += 8
    return best if best is not None else cin


def _reduce_kernel(x_ref, w_ref, y_ref, acc_ref, *, hw, hw_tile):
    # x_ref : [1, cin_tile, hw_tile]   (model dtype)
    # w_ref : [cin_tile, Cout]         (f32, BN scale folded in)
    # y_ref : [1, 1, 1, Cout]          (f32 partial: sum_hw(x_tile) @ w_tile)
    # acc_ref: VMEM [1, cin_tile] f32  running HW sum for this (n, cin_tile)
    t = pl.program_id(2)
    last = pl.num_programs(2) - 1

    @pl.when(t == 0)
    def _():
        acc_ref[...] = jnp.zeros_like(acc_ref)

    x = x_ref[...].astype(jnp.float32)  # f32 accumulation (needed for bf16 inputs)

    if hw % hw_tile != 0:
        # Only the final tile overlaps the padded tail: mask there only, with a
        # small (1,1,hw_tile) iota broadcast over Cin.
        @pl.when(t == last)
        def _():
            lane = jax.lax.broadcasted_iota(jnp.int32, (1, 1, hw_tile), 2)
            xm = jnp.where(lane + t * hw_tile < hw, x, 0.0)
            acc_ref[...] += jnp.sum(xm, axis=-1)

        @pl.when(t < last)
        def _():
            acc_ref[...] += jnp.sum(x, axis=-1)
    else:
        acc_ref[...] += jnp.sum(x, axis=-1)

    @pl.when(t == last)
    def _():
        partial = jnp.dot(acc_ref[...], w_ref[...],
                          preferred_element_type=jnp.float32)  # [1, Cout]
        y_ref[...] = partial[:, None, None, :]                 # [1,1,1,Cout]


def _broadcast_kernel(y_ref, o_ref):
    # y_ref: [1, Cout, 1] (f32) -> o_ref: [1, Cout, hw_tile_b] (model dtype)
    o_ref[...] = jnp.broadcast_to(y_ref[...], o_ref.shape).astype(o_ref.dtype)


def aspp_pooling(x, conv_w, bn_gamma, bn_beta, bn_mean, bn_var, eps=1e-5):
    """x: [N, Cin, H, W] (NCHW). conv_w: [Cout, Cin, 1, 1]. Returns [N, Cout, H, W]."""
    N, Cin, H, W = x.shape
    Cout = conv_w.shape[0]
    HW = H * W
    in_item = jnp.dtype(x.dtype).itemsize
    out_item = in_item

    # Fold BatchNorm (eval mode: running stats) into the 1x1 conv weight + bias.
    scale = (bn_gamma.astype(jnp.float32)
             / jnp.sqrt(bn_var.astype(jnp.float32) + eps))               # [Cout]
    bias = bn_beta.astype(jnp.float32) - bn_mean.astype(jnp.float32) * scale
    # Weight kept in f32 for exactness (tiny); the matmul accumulates in f32, so
    # it could be cast to bf16 if VMEM headroom is ever needed on v7x.
    w_scaled = (conv_w.reshape(Cout, Cin).T.astype(jnp.float32)
                * scale[None, :])                                         # [Cin, Cout]

    vmem_limit, x_budget = _vmem_budgets()

    # ---- Phase A: per-(sample, Cin-tile) HW sum + partial 1x1 conv ----
    cin_tile = _pick_cin_tile(Cin, HW, in_item, x_budget)
    hw_tile_a = _pick_hw_tile(HW, cin_tile, in_item, x_budget)
    n_cin = Cin // cin_tile
    n_hw_a = pl.cdiv(HW, hw_tile_a)
    # TODO(synk): for N==1 with un-tiled Cin on v7x, additionally split HW into
    # two "parallel" halves (extra partial outputs) so both TensorCores run.

    x3 = x.reshape(N, Cin, HW)
    partials = pl.pallas_call(
        functools.partial(_reduce_kernel, hw=HW, hw_tile=hw_tile_a),
        out_shape=jax.ShapeDtypeStruct((N, n_cin, 1, Cout), jnp.float32),
        grid=(N, n_cin, n_hw_a),
        in_specs=[
            pl.BlockSpec((1, cin_tile, hw_tile_a), lambda n, c, t: (n, c, t)),
            pl.BlockSpec((cin_tile, Cout), lambda n, c, t: (c, 0)),
        ],
        out_specs=pl.BlockSpec((1, 1, 1, Cout), lambda n, c, t: (n, c, 0, 0)),
        scratch_shapes=[pltpu.VMEM((1, cin_tile), jnp.float32)],
        compiler_params=pltpu.CompilerParams(
            dimension_semantics=("parallel", "parallel", "arbitrary"),
            vmem_limit_bytes=vmem_limit),
        cost_estimate=pl.CostEstimate(
            flops=int(N * Cin * HW + 2 * N * Cin * Cout),
            transcendentals=0,
            bytes_accessed=int(N * Cin * HW * in_item
                               + N * Cin * Cout * 4 + N * n_cin * Cout * 4)),
    )(x3, w_scaled)

    # Tiny combine (N*Cout values): sum partial matmuls over Cin tiles, apply
    # the pooling mean, folded BN bias and ReLU.
    y = jnp.sum(partials[:, :, 0, :], axis=1)                    # [N, Cout]
    y = jnp.maximum(y * (1.0 / HW) + bias[None, :], 0.0)
    y3 = y[:, :, None]                                           # [N, Cout, 1] f32

    # ---- Phase B: broadcast over HxW (bilinear resize of a 1x1 map) ----
    # Independent, Cout-budgeted lane tile: much larger than Phase A's tile.
    hw_tile_b = _pick_hw_tile(HW, Cout, out_item, x_budget)
    n_hw_b = pl.cdiv(HW, hw_tile_b)
    out = pl.pallas_call(
        _broadcast_kernel,
        out_shape=jax.ShapeDtypeStruct((N, Cout, HW), x.dtype),
        grid=(N, n_hw_b),
        in_specs=[pl.BlockSpec((1, Cout, 1), lambda n, t: (n, 0, 0))],
        out_specs=pl.BlockSpec((1, Cout, hw_tile_b), lambda n, t: (n, 0, t)),
        compiler_params=pltpu.CompilerParams(
            dimension_semantics=("parallel", "parallel"),
            vmem_limit_bytes=vmem_limit),
        cost_estimate=pl.CostEstimate(
            flops=0,
            transcendentals=0,
            bytes_accessed=int(N * Cout * HW * out_item + N * Cout * 4)),
    )(y3)

    return out.reshape(N, Cout, H, W)


if __name__ == "__main__":
    key = jax.random.PRNGKey(0)
    k_x, k_w = jax.random.split(key)

    N, Cin, Cout, H, W = 2, 4, 8, 16, 16

    x = jax.random.normal(k_x, (N, Cin, H, W), dtype=jnp.float32)
    conv_w = jax.random.normal(k_w, (Cout, Cin, 1, 1), dtype=jnp.float32) * 0.1

    # BatchNorm2d default-initialized parameters / running stats (eval mode).
    bn_gamma = jnp.ones((Cout,), dtype=jnp.float32)
    bn_beta = jnp.zeros((Cout,), dtype=jnp.float32)
    bn_mean = jnp.zeros((Cout,), dtype=jnp.float32)
    bn_var = jnp.ones((Cout,), dtype=jnp.float32)

    out = aspp_pooling(x, conv_w, bn_gamma, bn_beta, bn_mean, bn_var)
    out = jax.block_until_ready(out)

    # Pure-JAX reference check.
    pooled_ref = jnp.mean(x, axis=(2, 3))                           # [N, Cin]
    y_ref = pooled_ref @ conv_w.reshape(Cout, Cin).T                # [N, Cout]
    scale_ref = bn_gamma / jnp.sqrt(bn_var + 1e-5)
    y_ref = jnp.maximum(y_ref * scale_ref + (bn_beta - bn_mean * scale_ref), 0.0)
    ref = jnp.broadcast_to(y_ref[:, :, None, None], (N, Cout, H, W))
    assert out.shape == (N, Cout, H, W)
    assert jnp.allclose(out, ref, atol=1e-5, rtol=1e-5)

    print("KERNEL_OK")
</pallas_src>

<mosaic_0001>
module attributes {stable_mosaic.version = 11 : i64} {
  func.func @_reduce_kernel(%arg0: i32, %arg1: i32, %arg2: i32, %arg3: memref<1x4x256xf32, #tpu.memory_space<vmem>>, %arg4: memref<4x8xf32, #tpu.memory_space<vmem>>, %arg5: memref<1x1x1x8xf32, #tpu.memory_space<vmem>>, %arg6: memref<1x4xf32, #tpu.memory_space<vmem>>) attributes {dimension_semantics = [#tpu.dimension_semantics<parallel>, #tpu.dimension_semantics<parallel>, #tpu.dimension_semantics<arbitrary>], iteration_bounds = array<i64: 2, 1, 1>, scalar_prefetch = 0 : i64, scratch_operands = 1 : i64, tpu.core_type = #tpu.core_type<tc>, window_params = [{transform_indices = @transform_0, window_bounds = array<i64: 1, 4, 256>}, {transform_indices = @transform_1, window_bounds = array<i64: 4, 8>}, {transform_indices = @transform_2, window_bounds = array<i64: 1, 1, 1, 8>}]} {
    %c0_i32 = arith.constant 0 : i32
    %0 = arith.cmpi eq, %arg2, %c0_i32 : i32
    %1 = arith.extui %0 : i1 to i32
    %c0_i32_0 = arith.constant 0 : i32
    %2 = arith.cmpi ne, %1, %c0_i32_0 : i32
    scf.if %2 {
      %cst_9 = arith.constant 0.000000e+00 : f32
      %11 = vector.broadcast %cst_9 : f32 to vector<1x4xf32>
      %c0_10 = arith.constant 0 : index
      %c0_11 = arith.constant 0 : index
      %12 = vector.load %arg6[%c0_10, %c0_11] : memref<1x4xf32, #tpu.memory_space<vmem>>, vector<1x4xf32>
      tpu.vector_store %arg6[%c0_10, %c0_11], %11 {strides = array<i32>} : memref<1x4xf32, #tpu.memory_space<vmem>>, vector<1x4xf32>,
    } else {
    }
    %c0 = arith.constant 0 : index
    %c0_1 = arith.constant 0 : index
    %c0_2 = arith.constant 0 : index
    %3 = vector.load %arg3[%c0, %c0_1, %c0_2] : memref<1x4x256xf32, #tpu.memory_space<vmem>>, vector<1x4x256xf32>
    %c0_3 = arith.constant 0 : index
    %c0_4 = arith.constant 0 : index
    %4 = vector.load %arg6[%c0_3, %c0_4] : memref<1x4xf32, #tpu.memory_space<vmem>>, vector<1x4xf32>
    %cst = arith.constant dense<0.000000e+00> : vector<1x4xf32>
    %5 = vector.multi_reduction <add>, %3, %cst [2] : vector<1x4x256xf32> to vector<1x4xf32>
    %6 = arith.addf %4, %5 : vector<1x4xf32>
    %c0_5 = arith.constant 0 : index
    %c0_6 = arith.constant 0 : index
    %7 = vector.load %arg6[%c0_5, %c0_6] : memref<1x4xf32, #tpu.memory_space<vmem>>, vector<1x4xf32>
    tpu.vector_store %arg6[%c0_5, %c0_6], %6 {strides = array<i32>} : memref<1x4xf32, #tpu.memory_space<vmem>>, vector<1x4xf32>,
    %c0_i32_7 = arith.constant 0 : i32
    %8 = arith.cmpi eq, %arg2, %c0_i32_7 : i32
    %9 = arith.extui %8 : i1 to i32
    %c0_i32_8 = arith.constant 0 : i32
    %10 = arith.cmpi ne, %9, %c0_i32_8 : i32
    scf.if %10 {
      %c0_9 = arith.constant 0 : index
      %c0_10 = arith.constant 0 : index
      %11 = vector.load %arg6[%c0_9, %c0_10] : memref<1x4xf32, #tpu.memory_space<vmem>>, vector<1x4xf32>
      %c0_11 = arith.constant 0 : index
      %c0_12 = arith.constant 0 : index
      %12 = vector.load %arg4[%c0_11, %c0_12] : memref<4x8xf32, #tpu.memory_space<vmem>>, vector<4x8xf32>
      %cst_13 = arith.constant dense<0.000000e+00> : vector<1x8xf32>
      %13 = tpu.matmul %11, %12, %cst_13 {dimension_numbers = #tpu.dot_dimension_numbers<[1], [0], [0], [1], [0, 0, 1, 1], [], []>} : vector<1x4xf32>, vector<4x8xf32>, vector<1x8xf32> -> vector<1x8xf32>
      %14 = vector.shape_cast %13 : vector<1x8xf32> to vector<1x1x1x8xf32>
      %c0_14 = arith.constant 0 : index
      %c0_15 = arith.constant 0 : index
      %c0_16 = arith.constant 0 : index
      %c0_17 = arith.constant 0 : index
      %15 = vector.load %arg5[%c0_14, %c0_15, %c0_16, %c0_17] : memref<1x1x1x8xf32, #tpu.memory_space<vmem>>, vector<1x1x1x8xf32>
      tpu.vector_store %arg5[%c0_14, %c0_15, %c0_16, %c0_17], %14 {strides = array<i32>} : memref<1x1x1x8xf32, #tpu.memory_space<vmem>>, vector<1x1x1x8xf32>,
    } else {
    }
    return
  }
  func.func @transform_0(%arg0: i32, %arg1: i32, %arg2: i32) -> (i32, i32, i32) {
    %c0_i32 = arith.constant 0 : i32
    return %arg0, %arg1, %arg2 : i32, i32, i32
  }
  func.func @transform_1(%arg0: i32, %arg1: i32, %arg2: i32) -> (i32, i32) {
    %c0_i32 = arith.constant 0 : i32
    %c0_i32_0 = arith.constant 0 : i32
    return %arg1, %c0_i32 : i32, i32
  }
  func.func @transform_2(%arg0: i32, %arg1: i32, %arg2: i32) -> (i32, i32, i32, i32) {
    %c0_i32 = arith.constant 0 : i32
    %c0_i32_0 = arith.constant 0 : i32
    %c0_i32_1 = arith.constant 0 : i32
    return %arg0, %arg1, %c0_i32, %c0_i32_0 : i32, i32, i32, i32
  }
}

</mosaic_0001>

<llo_original>
// kernel: tpu_custom_call.1
$region0: #{tpu_custom_call.1}
  #allocation0 [shape = 'u32[]', space=smem, size = 0x4, offset = 0x4, fixed_abs, tag = 'smem constant byte address 0x4 - core index']
  #allocation1 [shape = 'u32[144,128]{1,0:T(1,128)}', space=vmem, size = 0x12000, scoped, tag = 'internal scratch']
  #allocation2 [shape = 'f32[1,4]{1,0:T(1,128)}', space=vmem, size = 0x200, scoped, tag = 'scratch operand']
  %s0 = inlined_call_operand.hbm [shape: f32[2,4,256], index: 0, kind: input, shape index: {}]
  %s1 = inlined_call_operand.hbm [shape: f32[4,8], index: 1, kind: input, shape index: {}]
  %s2 = inlined_call_operand.hbm [shape: f32[2,1,1,8], index: 2, kind: output, shape index: {}]
  %s3 = sld [smem:[#allocation0]]
  $region57: #{tpu_custom_call.1} parent=0
    _
  %s5 = ssub.s32 1, %s3
  %s6 = scalar_select 0, %s5, %s3
  $region1: #{tpu_custom_call.1} parent=0
    #allocation3 [shape = 'u8[8192]{0}', space=vmem, size = 0x2000, scoped, tag = 'input window, operand 0']
    #allocation4 [shape = 's32[2]{0}', space=sflag, size = 0x8, scoped, tag = 'scoped memory for tpu_custom_call.1']
    #allocation5 [shape = 's32[2]{0}', space=sflag, size = 0x8, scoped, tag = 'scoped memory for tpu_custom_call.1']
    #allocation6 [shape = 'u8[2048]{0}', space=vmem, size = 0x800, scoped, tag = 'input window, operand 1, single buffered']
    #allocation7 [shape = 's32[1]{0}', space=sflag, size = 0x4, scoped, tag = 'scoped memory for tpu_custom_call.1']
    #allocation8 [shape = 'u8[1024]{0}', space=vmem, size = 0x400, scoped, tag = 'output window, operand 0']
    %7 = vsyncpa [#allocation4], 0
    %s8 = scalar_lea.sflag [#allocation4], 1
    %9 = vsyncpa %s8, 0
    %10 = vsyncpa [#allocation7], 0
    %11 = vsyncpa [#allocation5], 0
    %s12 = scalar_lea.sflag [#allocation5], 1
    %13 = vsyncpa %s12, 0
    loop: start=0, step=1, limit=4
    $region2: #{tpu_custom_call.1} parent=1 // loop_pre_header
      _
    $region3: #{tpu_custom_call.1} parent=1 // loop_header
      %s15 = sphi 0, %s19
      %p16 = scmp.ge.s32.totalorder %s15, 4
      %s22 = sphi 0, %s41
      %s23 = sphi 0, %s37
      %s24 = sphi 0, %s33
      %s25 = sphi 0, %s22
      %s26 = sphi 0, %s23
      %s27 = sphi 0, %s24
      %s28 = sphi 0, %s25
      %s29 = sphi 0, %s26
      %s30 = sphi 0, %s27
      %s48 = sphi 0, %s50
      %s51 = sphi 0, %s48
      %s52 = sphi 0, %s51
      %s68 = sphi 0, %s52
      %s74 = sphi 0, %s76
      %s77 = sphi 0, %s74
      %s78 = sphi 0, %s77
      %s94 = sphi 0, %s78
      %s102 = sphi 0, %s104
      %s105 = sphi 0, %s102
      %s106 = sphi 0, %s105
      %s122 = sphi 0, %s106
    $region4: #{tpu_custom_call.1} parent=1 // loop_header_branch
      %18 = sbr.rel (%p16) target = $region8
    $region5: #{tpu_custom_call.1} parent=1 // loop_body
      %s20 = ssub.s32 %s15, 1
      %s21 = ssub.s32 %s15, 2
      %s31 = sadd.s32 1, %s24
      %p32 = scmp.ge.s32.totalorder %s31, 1
      %s33 = scalar_select %p32, 0, %s31
      %s34 = sadd.s32 1, %s23
      %s35 = scalar_select %p32, %s34, %s23
      %p36 = scmp.ge.s32.totalorder %s35, 1
      %s37 = scalar_select %p36, 0, %s35
      %s38 = sadd.s32 1, %s22
      %s39 = scalar_select %p36, %s38, %s22
      %p40 = scmp.ge.s32.totalorder %s39, 2
      %s41 = scalar_select %p40, 0, %s39
      %s42 = ssub.s32 %s22, %s41
      %s43 = ssub.s32 %s23, %s37
      %s44 = sor.u32 %s42, %s43
      %s45 = ssub.s32 %s24, %s33
      %s46 = sor.u32 %s44, %s45
      %p47 = scmp.eq.s32.totalorder %s46, 0
      %s49 = sadd.s32 %s48, 1
      %s50 = scalar_select %p47, %s48, %s49
      %p53 = pneg %p47
      %p54 = scmp.eq.s32.totalorder %s15, 1
      %p55 = por %p53, %p54
      %p56 = scmp.ne.s32.totalorder %s48, %s51
      %p57 = scmp.eq.s32.totalorder %s15, 0
      %p58 = por %p56, %p57
      %p59 = scmp.ne.s32.totalorder %s48, %s51
      %p60 = scmp.eq.s32.totalorder %s20, 1
      %p61 = por %p59, %p60
      %p62 = scmp.ne.s32.totalorder %s51, %s52
      %p63 = scmp.eq.s32.totalorder %s20, 0
      %p64 = por %p62, %p63
      %p65 = scmp.ne.s32.totalorder %s51, %s52
      %p66 = scmp.eq.s32.totalorder %s21, 1
      %p67 = por %p65, %p66
      %p69 = scmp.ne.s32.totalorder %s52, %s68
      %p70 = scmp.eq.s32.totalorder %s21, 0
      %p71 = por %p69, %p70
      %s72 = ssub.s32 %s23, %s37
      %p73 = scmp.eq.s32.totalorder %s72, 0
      %s75 = sadd.s32 %s74, 1
      %s76 = scalar_select %p73, %s74, %s75
      %p79 = pneg %p73
      %p80 = scmp.eq.s32.totalorder %s15, 1
      %p81 = por %p79, %p80
      %p82 = scmp.ne.s32.totalorder %s74, %s77
      %p83 = scmp.eq.s32.totalorder %s15, 0
      %p84 = por %p82, %p83
      %p85 = scmp.ne.s32.totalorder %s74, %s77
      %p86 = scmp.eq.s32.totalorder %s20, 1
      %p87 = por %p85, %p86
      %p88 = scmp.ne.s32.totalorder %s77, %s78
      %p89 = scmp.eq.s32.totalorder %s20, 0
      %p90 = por %p88, %p89
      %p91 = scmp.ne.s32.totalorder %s77, %s78
      %p92 = scmp.eq.s32.totalorder %s21, 1
      %p93 = por %p91, %p92
      %p95 = scmp.ne.s32.totalorder %s78, %s94
      %p96 = scmp.eq.s32.totalorder %s21, 0
      %p97 = por %p95, %p96
      %s98 = ssub.s32 %s22, %s41
      %s99 = ssub.s32 %s23, %s37
      %s100 = sor.u32 %s98, %s99
      %p101 = scmp.eq.s32.totalorder %s100, 0
      %s103 = sadd.s32 %s102, 1
      %s104 = scalar_select %p101, %s102, %s103
      %p107 = pneg %p101
      %p108 = scmp.eq.s32.totalorder %s15, 1
      %p109 = por %p107, %p108
      %p110 = scmp.ne.s32.totalorder %s102, %s105
      %p111 = scmp.eq.s32.totalorder %s15, 0
      %p112 = por %p110, %p111
      %p113 = scmp.ne.s32.totalorder %s102, %s105
      %p114 = scmp.eq.s32.totalorder %s20, 1
      %p115 = por %p113, %p114
      %p116 = scmp.ne.s32.totalorder %s105, %s106
      %p117 = scmp.eq.s32.totalorder %s20, 0
      %p118 = por %p116, %p117
      %p119 = scmp.ne.s32.totalorder %s105, %s106
      %p120 = scmp.eq.s32.totalorder %s21, 1
      %p121 = por %p119, %p120
      %p123 = scmp.ne.s32.totalorder %s106, %s122
      %p124 = scmp.eq.s32.totalorder %s21, 0
      %p125 = por %p123, %p124
      %p126 = scmp.le.s32.totalorder 1, %s15
      %p127 = scmp.lt.s32.totalorder %s15, 3
      %p128 = pnand %p126, %p127
      %p129 = pneg %p128
      // Predicated region
      $region9: #{tpu_custom_call.1} parent=5 // pred_check
        _
      $region10: #{tpu_custom_call.1} parent=5 // pred_check_branch
        %131 = sbr.rel (%p128) target = $region12
      $region11: #{tpu_custom_call.1} parent=5 // pred_region
        %s132 = ssub.s32 %s15, 1
        // Predicated region
        $region13: #{tpu_custom_call.1} parent=11 // pred_check
          %p133 = pneg %p90
        $region14: #{tpu_custom_call.1} parent=11 // pred_check_branch
          %135 = sbr.rel (%p133) target = $region16
        $region15: #{tpu_custom_call.1} parent=11 // pred_region
          %s137 = ssub.s32 64, 64
          %138 = vsyncadd [#allocation7], %s137
          %s139 = smul.addr %s26, 64
          %s140 = scalar_lea.hbm %s1, %s139
          %s142 = sshll.u32 [#allocation6], 4
          %s143 = int_to_ptr.vmem [resolvable:$true] %s142
          %145 = dma.hbm_to_vmem [thread:$0]  %s140, 64, %s143, [#allocation7]
        $region16: #{tpu_custom_call.1} parent=11 // pred_fallthru
          _
      $region12: #{tpu_custom_call.1} parent=5 // pred_fallthru
        _
      %p146 = scmp.lt.s32.totalorder %s15, 2
      // Predicated region
      $region17: #{tpu_custom_call.1} parent=5 // pred_check
        %p147 = pneg %p146
      $region18: #{tpu_custom_call.1} parent=5 // pred_check_branch
        %149 = sbr.rel (%p147) target = $region20
      $region19: #{tpu_custom_call.1} parent=5 // pred_region
        // Predicated region
        $region21: #{tpu_custom_call.1} parent=19 // pred_check
          %p150 = pneg %p58
        $region22: #{tpu_custom_call.1} parent=19 // pred_check_branch
          %152 = sbr.rel (%p150) target = $region24
        $region23: #{tpu_custom_call.1} parent=19 // pred_region
          %s153 = sand.u32 %s48, 1
          %s154 = scalar_lea.sflag [#allocation4], %s153
          %s155 = sand.u32 %s48, 1
          %s156 = smul.addr %s155, 8
          %s157 = scalar_lea.vmem [#allocation3], %s156
          %s158 = smul.u32 2, %s24
          %s160 = ssub.s32 128, 128
          %161 = vsyncadd %s154, %s160
          %s162 = smul.addr %s23, 2
          %s163 = sadd.s32 %s158, %s162
          %s164 = smul.addr %s22, 2
          %s165 = sadd.s32 %s163, %s164
          %s166 = smul.addr %s165, 64
          %s167 = scalar_lea.hbm %s0, %s166
          %s169 = sshll.u32 %s157, 4
          %s170 = int_to_ptr.vmem [resolvable:$true] %s169
          %172 = dma.hbm_to_vmem [thread:$0]  %s167, 128, %s170, %s154
        $region24: #{tpu_custom_call.1} parent=19 // pred_fallthru
          _
      $region20: #{tpu_custom_call.1} parent=5 // pred_fallthru
        _
      %p173 = scmp.le.s32.totalorder 1, %s15
      %p174 = scmp.lt.s32.totalorder %s15, 3
      %p175 = pnand %p173, %p174
      %p176 = pneg %p175
      // Predicated region
      $region25: #{tpu_custom_call.1} parent=5 // pred_check
        _
      $region26: #{tpu_custom_call.1} parent=5 // pred_check_branch
        %178 = sbr.rel (%p175) target = $region28
      $region27: #{tpu_custom_call.1} parent=5 // pred_region
        %s179 = ssub.s32 %s15, 1
        %s180 = sand.u32 %s51, 1
        %s181 = scalar_lea.sflag [#allocation4], %s180
        %s182 = sand.u32 %s51, 1
        %s183 = smul.addr %s182, 8
        %s184 = scalar_lea.vmem [#allocation3], %s183
        // Predicated region
        $region29: #{tpu_custom_call.1} parent=27 // pred_check
          %p185 = pneg %p64
        $region30: #{tpu_custom_call.1} parent=27 // pred_check_branch
          %187 = sbr.rel (%p185) target = $region32
        $region31: #{tpu_custom_call.1} parent=27 // pred_region
          %188 = dma.done %s181, 128
        $region32: #{tpu_custom_call.1} parent=27 // pred_fallthru
          _
        // Predicated region
        $region33: #{tpu_custom_call.1} parent=27 // pred_check
          %p189 = pneg %p90
        $region34: #{tpu_custom_call.1} parent=27 // pred_check_branch
          %191 = sbr.rel (%p189) target = $region36
        $region35: #{tpu_custom_call.1} parent=27 // pred_region
          %192 = dma.done [#allocation7], 64
        $region36: #{tpu_custom_call.1} parent=27 // pred_fallthru
          _
        %s193 = sand.u32 %s51, 1
        %s194 = scalar_lea.sflag [#allocation4], %s193
        %s195 = sand.u32 %s51, 1
        %s196 = smul.addr %s195, 8
        %s197 = scalar_lea.vmem [#allocation3], %s196
        %p198 = pneg %p64
        %p199 = pneg %p61
        %p200 = pneg %p90
        %p201 = pneg %p87
        %p202 = pneg %p118
        %p203 = pneg %p115
        %s204 = sand.u32 %s105, 1
        %s205 = scalar_lea.sflag [#allocation5], %s204
        %s206 = sand.u32 %s105, 1
        %s207 = scalar_lea.vmem [#allocation8], %s206
        %s208 = smul.u32 2, %s27
        %p209 = scmp.eq.s32.totalorder %s27, 0
        // Predicated region
        $region37: #{tpu_custom_call.1} parent=27 // pred_check
          %p210 = pneg %p209
        $region38: #{tpu_custom_call.1} parent=27 // pred_check_branch
          %212 = sbr.rel (%p210) target = $region40
        $region39: #{tpu_custom_call.1} parent=27 // pred_region
          %vm213 = vcmask 24576
          %214 = vst.msk [vmem:[#allocation2] sm:$0x1] %vm213, 0.0
        $region40: #{tpu_custom_call.1} parent=27 // pred_fallthru
          _
        %v215 = vld [vmem:[%s184] sm:$0xff]
        %v216 = vld [vmem:[#allocation2] sm:$0x1]
        %v218 = vcombine.high %v215, %v215
        %vm220 = vcmask 1043456
        %v221 = vsel %vm220, %v215, 0.0
        %v222 = vsel %vm220, %v218, 0.0
        %v223 = vadd.f32 %v221, %v222
        %224 = vadd.xlane.f32.xlu0 %v223
        %v225 = vpop.xlane.xlu0 %224
        %v227 = vlaneseq
        %v228 = vshrl.u32 %v227, 7
        %v229 = vsub.s32 0, %v228
        %v230 = vrot.slane %v225, %v229
        %v231 = vlaneseq
        %v232 = vshrl.u32 %v231, 7
        %v233 = vsub.s32 1, %v232
        %v234 = vrot.slane %v225, %v233
        %v235 = vlaneseq
        %v236 = vshrl.u32 %v235, 7
        %v237 = vsub.s32 2, %v236
        %v238 = vrot.slane %v225, %v237
        %v239 = vlaneseq
        %v240 = vshrl.u32 %v239, 7
        %v241 = vsub.s32 3, %v240
        %v242 = vrot.slane %v225, %v241
        %v243 = vcombine.low %v230, %v234
        %v244 = vcombine.low %v238, %v242
        %v246 = vunpack.c.l.s4 1966171168
        %v247 = vunpack.c.0.s8 %v246
        %v248 = vlaneseq
        %v249 = vshrl.u32 %v248, 7
        %v250 = vsub.s32 %v247, %v249
        %v251 = vrot.slane %v243, %v250
        %v253 = vunpack.c.l.s4 1966171168
        %v254 = vunpack.c.0.s8 %v253
        %v255 = vlaneseq
        %v256 = vshrl.u32 %v255, 7
        %v257 = vsub.s32 %v254, %v256
        %v258 = vrot.slane %v244, %v257
        %v259 = vcombine.low %v251, %v258
        %v261 = vunpack.c.l.s4 1966171168
        %v262 = vunpack.c.0.s8 %v261
        %v263 = vlaneseq
        %v264 = vshrl.u32 %v263, 7
        %v265 = vsub.s32 %v262, %v264
        %v266 = vrot.slane %v259, %v265
        %267 = vset.pattern.permute.xlu0 0
        %268 = vperm.xlu0 %267, %v266
        %v269 = vpop.permute.xlu0 %268
        %v270 = vlaneseq
        %v271 = vand.u32 %v270, 127
        %v272 = vlaneseq
        %v273 = vshrl.u32 %v272, 7
        %v274 = vsub.s32 %v271, %v273
        %v275 = vrot.slane %v269, %v274
        %v277 = vunpack.c.l.s4 1966171168
        %v278 = vunpack.c.0.s8 %v277
        %v279 = vlaneseq
        %v280 = vshrl.u32 %v279, 7
        %v281 = vsub.s32 %v278, %v280
        %v282 = vrot.slane %v275, %v281
        %v284 = vunpack.c.l.s4 1966171168
        %v285 = vunpack.c.0.s8 %v284
        %v286 = vlaneseq
        %v287 = vshrl.u32 %v286, 7
        %v288 = vsub.s32 %v285, %v287
        %v289 = vrot.slane %v282, %v288
        %v291 = vadd.f32 %v216, %v289
        %vm292 = vcmask 24576
        %293 = vst.msk [vmem:[#allocation2] sm:$0x1] %vm292, %v291
        // Predicated region
        $region41: #{tpu_custom_call.1} parent=27 // pred_check
          %p294 = pneg %p209
        $region42: #{tpu_custom_call.1} parent=27 // pred_check_branch
          %296 = sbr.rel (%p294) target = $region44
        $region43: #{tpu_custom_call.1} parent=27 // pred_region
          %v297 = vld [vmem:[#allocation2] sm:$0x1]
          %v298 = vld [vmem:[#allocation6] sm:$0xf]
          %vm299 = vcmask 31744
          %v301 = vsel %vm299, %v297, 0
          %v304 = vsel %vm220, %v298, 0
          %306 = vmatprep.subr.mxu0 0.0
          %307 = vmatpush1.msra.mxu0 %v304
          %308 = vmatprep.subr.mxu0 0.0
          %309 = vmatpush1.msra.mxu0 0.0
          %310 = vmatprep.subr.mxu0 0.0
          %311 = vmatpush1.msra.mxu0 0.0
          %312 = vmatprep.subr.mxu0 0.0
          %313 = vmatpush1.msra.mxu0 0.0
          %314 = vmatprep.subr.mxu0 0.0
          %315 = vmatpush1.msra.mxu0 0.0
          %316 = vmatprep.subr.mxu0 0.0
          %317 = vmatpush1.msra.mxu0 0.0
          %318 = vmatprep.subr.mxu0 0.0
          %319 = vmatpush1.msra.mxu0 0.0
          %320 = vmatprep.subr.mxu0 0.0
          %321 = vmatpush1.msra.mxu0 0.0
          %322 = vmatprep.subr.mxu0 0.0
          %323 = vmatpush1.msra.mxu0 0.0
          %324 = vmatprep.subr.mxu0 0.0
          %325 = vmatpush1.msra.mxu0 0.0
          %326 = vmatprep.subr.mxu0 0.0
          %327 = vmatpush1.msra.mxu0 0.0
          %328 = vmatprep.subr.mxu0 0.0
          %329 = vmatpush1.msra.mxu0 0.0
          %330 = vmatprep.subr.mxu0 0.0
          %331 = vmatpush1.msra.mxu0 0.0
          %332 = vmatprep.subr.mxu0 0.0
          %333 = vmatpush1.msra.mxu0 0.0
          %334 = vmatprep.subr.mxu0 0.0
          %335 = vmatpush1.msra.mxu0 0.0
          %336 = vmatprep.subr.mxu0 0.0
          %337 = vmatpush1.msra.mxu0 0.0
          %338 = vmatprep.subr.mxu0 0.0
          %339 = vmatpush1.msra.mxu0 0.0
          %340 = vmatprep.subr.mxu0 0.0
          %341 = vmatpush1.msra.mxu0 0.0
          %342 = vmatprep.subr.mxu0 0.0
          %343 = vmatpush1.msra.mxu0 0.0
          %344 = vmatprep.subr.mxu0 0.0
          %345 = vmatpush1.msra.mxu0 0.0
          %346 = vmatprep.subr.mxu0 0.0
          %347 = vmatpush1.msra.mxu0 0.0
          %348 = vmatprep.subr.mxu0 0.0
          %349 = vmatpush1.msra.mxu0 0.0
          %350 = vmatprep.subr.mxu0 0.0
          %351 = vmatpush1.msra.mxu0 0.0
          %352 = vmatprep.subr.mxu0 0.0
          %353 = vmatpush1.msra.mxu0 0.0
          %354 = vmatprep.subr.mxu0 0.0
          %355 = vmatpush1.msra.mxu0 0.0
          %356 = vmatprep.subr.mxu0 0.0
          %357 = vmatpush1.msra.mxu0 0.0
          %358 = vmatprep.subr.mxu0 0.0
          %359 = vmatpush1.msra.mxu0 0.0
          %360 = vmatprep.subr.mxu0 0.0
          %361 = vmatpush1.msra.mxu0 0.0
          %362 = vmatprep.subr.mxu0 0.0
          %363 = vmatpush1.msra.mxu0 0.0
          %364 = vmatprep.subr.mxu0 0.0
          %365 = vmatpush1.msra.mxu0 0.0
          %366 = vmatprep.subr.mxu0 0.0
          %367 = vmatpush1.msra.mxu0 0.0
          %368 = vmatprep.subr.mxu0 0.0
          %369 = vmatpush1.msra.mxu0 0.0
          %370 = vmatprep.mubr.f32.mxu0 0.0
          %371 = vmatmul.mubr.f32.gmra.mrb[0].mxu0 %v301
          %v372 = vpop.f32.mrb[0].mxu0
          %v373 = vadd.f32 0.0, %v372
          %v374 = vpop.f32.mrb[0].mxu0
          %375 = vdwg.mxu0
          %vm376 = vcmask 57344
          %377 = vst.msk [vmem:[%s207] sm:$0x1] %vm376, %v373
        $region44: #{tpu_custom_call.1} parent=27 // pred_fallthru
          _
        %s378 = sand.u32 %s105, 1
        %s379 = scalar_lea.sflag [#allocation5], %s378
        %s380 = sand.u32 %s105, 1
        %s381 = scalar_lea.vmem [#allocation8], %s380
        // Predicated region
        $region45: #{tpu_custom_call.1} parent=27 // pred_check
          %p382 = pneg %p115
        $region46: #{tpu_custom_call.1} parent=27 // pred_check_branch
          %384 = sbr.rel (%p382) target = $region48
        $region47: #{tpu_custom_call.1} parent=27 // pred_region
          %s386 = ssub.s32 16, 16
          %387 = vsyncadd %s379, %s386
          %s388 = sadd.s32 %s26, %s25
          %s389 = smul.addr %s388, 16
          %s390 = scalar_lea.hbm %s2, %s389
          %s392 = sshll.u32 %s381, 4
          %s393 = int_to_ptr.vmem [resolvable:$true] %s392
          %395 = dma.vmem_to_hbm [thread:$0]  %s393, 16, %s390, %s379
        $region48: #{tpu_custom_call.1} parent=27 // pred_fallthru
          _
      $region28: #{tpu_custom_call.1} parent=5 // pred_fallthru
        _
      %p396 = scmp.le.s32.totalorder 2, %s15
      // Predicated region
      $region49: #{tpu_custom_call.1} parent=5 // pred_check
        %p397 = pneg %p396
      $region50: #{tpu_custom_call.1} parent=5 // pred_check_branch
        %399 = sbr.rel (%p397) target = $region52
      $region51: #{tpu_custom_call.1} parent=5 // pred_region
        %s400 = ssub.s32 %s15, 2
        // Predicated region
        $region53: #{tpu_custom_call.1} parent=51 // pred_check
          %p401 = pneg %p121
        $region54: #{tpu_custom_call.1} parent=51 // pred_check_branch
          %403 = sbr.rel (%p401) target = $region56
        $region55: #{tpu_custom_call.1} parent=51 // pred_region
          %s404 = sand.u32 %s106, 1
          %s405 = scalar_lea.sflag [#allocation5], %s404
          %s406 = sand.u32 %s106, 1
          %s407 = scalar_lea.vmem [#allocation8], %s406
          %408 = dma.done %s405, 16
        $region56: #{tpu_custom_call.1} parent=51 // pred_fallthru
          _
      $region52: #{tpu_custom_call.1} parent=5 // pred_fallthru
        _
    $region6: #{tpu_custom_call.1} parent=1 // loop_footer
      %s19 = sadd.s32 1, %s15
    $region7: #{tpu_custom_call.1} parent=1 // loop_footer_branch
      %14 = sbr.rel target = $region3
    $region8: #{tpu_custom_call.1} parent=1 // loop_exit
      _
    %409 = vsyncpa [#allocation4], 1
    %s410 = scalar_lea.sflag [#allocation4], 1
    %411 = vsyncpa %s410, 1
    %412 = vsyncpa [#allocation7], 1
    %413 = vsyncpa [#allocation5], 1
    %s414 = scalar_lea.sflag [#allocation5], 1
    %415 = vsyncpa %s414, 1

</llo_original>
